<compile_context>
chip_gen: v6e
topology: v6e:2x2x1
jax: 0.10.0
libtpu: 0.0.40
codegen_flags: <defaults>
</compile_context>

<pallas_src>
import jax
import jax.numpy as jnp
from jax.experimental import pallas as pl
from jax.experimental.pallas import tpu as pltpu


IN_FEATURES = 784      # 1 * 28 * 28
HIDDEN = 128
NUM_CLASSES = 10
PADDED_CLASSES = 128   # lane-dense fc2 width inside the kernel
_TILE_ROWS = 1024      # batch tile (multiple of 8); sweep 1024-2048 if desired
_SMALL_BATCH = 256     # below this, single-block latency path
_MASK_VALUE = -1e30    # mask for padded logit columns (exp underflows to 0)


def _mlp_kernel(x_ref, w1_ref, b1_ref, w2_ref, b2_ref, o_ref):
    # x_ref:  (tn, 784)             streamed batch tile (f32 or bf16)
    # w1_ref: (784, 128)            resident, matmul-operand dtype
    # b1_ref: (1, 128)              resident, f32
    # w2_ref: (128, 128)            resident, zero-padded past col 10, operand dtype
    # b2_ref: (1, 128)              resident, f32, zero-padded past col 10
    # o_ref:  (tn, 10)              log-probs (only the real class lanes)
    x = x_ref[...].astype(w1_ref.dtype)   # bf16 MXU operands (f32 accumulate)

    # fc1 + ReLU: MXU matmul with f32 accumulation; bias/ReLU on VPU in f32.
    h = jnp.dot(x, w1_ref[...], preferred_element_type=jnp.float32) + b1_ref[...]
    h = jnp.maximum(h, 0.0)

    # fc2 on the padded 128-lane weight tile (full MXU N-tile).
    logits = jnp.dot(h.astype(w2_ref.dtype), w2_ref[...],
                     preferred_element_type=jnp.float32) + b2_ref[...]

    # Mask padded columns so they do not perturb the softmax denominator.
    col = jax.lax.broadcasted_iota(jnp.int32, logits.shape, 1)
    logits = jnp.where(col < NUM_CLASSES, logits, jnp.float32(_MASK_VALUE))

    # Numerically stable log_softmax over the 128 padded lanes (f32 throughout).
    m = jnp.max(logits, axis=-1, keepdims=True)
    shifted = logits - m
    lse = jnp.log(jnp.sum(jnp.exp(shifted), axis=-1, keepdims=True))

    # Store only the real class lanes; padded (~ -1e30) columns never hit HBM.
    o_ref[...] = (shifted - lse)[:, :NUM_CLASSES].astype(o_ref.dtype)


def prepare_params(w1, b1, w2, b2, operand_dtype=jnp.bfloat16):
    """One-time parameter prep (hoisted out of the per-call hot path).

    Weights are stored (in_features, out_features): the kernel computes
    x @ W + b, matching PyTorch's x @ W_pt.T + b with W = W_pt.T.
    fc2 is zero-padded 10 -> 128 lanes; padded columns are masked in-kernel.
    """
    w1p = w1.astype(operand_dtype)
    b1p = b1.reshape(1, HIDDEN).astype(jnp.float32)
    w2p = jnp.zeros((HIDDEN, PADDED_CLASSES), operand_dtype).at[:, :NUM_CLASSES].set(
        w2.astype(operand_dtype))
    b2p = jnp.zeros((1, PADDED_CLASSES), jnp.float32).at[:, :NUM_CLASSES].set(
        b2.reshape(1, NUM_CLASSES).astype(jnp.float32))
    return w1p, b1p, w2p, b2p


def fully_connected_net_forward(x_nchw, prepared_params):
    """x_nchw: (N, 1, 28, 28) -> log-probs (N, 10) float32.

    `prepared_params` comes from prepare_params().  x may be f32 or bf16;
    streaming bf16 from the input pipeline halves x HBM bytes at large N.
    """
    w1p, b1p, w2p, b2p = prepared_params
    n = x_nchw.shape[0]
    x_flat = x_nchw.reshape(n, -1)  # torch.flatten(x, 1)
    assert x_flat.shape[1] == IN_FEATURES

    # Tile selection:
    #  * small batches: one block (launch/DMA-latency bound).
    #  * large batches: >= 2 roughly balanced steps (v7x megacore), capped at
    #    _TILE_ROWS; pl.cdiv handles any ragged last tile.
    if n <= _SMALL_BATCH:
        tn = n
    else:
        half = -(-n // 2)            # cdiv(n, 2)
        half = -(-half // 8) * 8     # round up to a multiple of 8 (sublane)
        tn = min(_TILE_ROWS, half)
    grid = (pl.cdiv(n, tn),)

    cost = pl.CostEstimate(
        flops=2 * n * (IN_FEATURES * HIDDEN + HIDDEN * PADDED_CLASSES),
        transcendentals=n * (PADDED_CLASSES + 1),
        bytes_accessed=(n * IN_FEATURES * x_flat.dtype.itemsize
                        + IN_FEATURES * HIDDEN * w1p.dtype.itemsize
                        + HIDDEN * 4
                        + HIDDEN * PADDED_CLASSES * w2p.dtype.itemsize
                        + PADDED_CLASSES * 4
                        + n * NUM_CLASSES * 4),
    )

    return pl.pallas_call(
        _mlp_kernel,
        out_shape=jax.ShapeDtypeStruct((n, NUM_CLASSES), jnp.float32),
        grid=grid,
        in_specs=[
            pl.BlockSpec((tn, IN_FEATURES), lambda i: (i, 0)),         # x: streamed
            pl.BlockSpec((IN_FEATURES, HIDDEN), lambda i: (0, 0)),     # w1: resident
            pl.BlockSpec((1, HIDDEN), lambda i: (0, 0)),               # b1: resident
            pl.BlockSpec((HIDDEN, PADDED_CLASSES), lambda i: (0, 0)),  # w2p: resident
            pl.BlockSpec((1, PADDED_CLASSES), lambda i: (0, 0)),       # b2p: resident
        ],
        out_specs=pl.BlockSpec((tn, NUM_CLASSES), lambda i: (i, 0)),
        compiler_params=pltpu.CompilerParams(dimension_semantics=("parallel",)),
        cost_estimate=cost,
    )(x_flat, w1p, b1p, w2p, b2p)


def init_params(key):
    """Deterministic synthetic parameters with the module's shapes.

    fc1: Linear(784, 128)  -> w1 (784, 128), b1 (1, 128)
    fc2: Linear(128, 10)   -> w2 (128, 10),  b2 (1, 10)
    """
    k1, k2, k3, k4 = jax.random.split(key, 4)
    w1 = jax.random.normal(k1, (IN_FEATURES, HIDDEN), jnp.float32) / jnp.sqrt(784.0)
    b1 = jax.random.normal(k2, (1, HIDDEN), jnp.float32) * 0.01
    w2 = jax.random.normal(k3, (HIDDEN, NUM_CLASSES), jnp.float32) / jnp.sqrt(128.0)
    b2 = jax.random.normal(k4, (1, NUM_CLASSES), jnp.float32) * 0.01
    return w1, b1, w2, b2


def _reference_forward(x_nchw, w1, b1, w2, b2):
    x = x_nchw.reshape(x_nchw.shape[0], -1)
    h = jnp.maximum(x @ w1 + b1, 0.0)
    logits = h @ w2 + b2
    return jax.nn.log_softmax(logits, axis=1)


if __name__ == "__main__":
    key = jax.random.PRNGKey(0)
    kx1, kx2, kp = jax.random.split(key, 3)
    w1, b1, w2, b2 = init_params(kp)

    # One-time parameter prep (bf16 matmul operands by default; also an exact
    # f32-operand variant for precision checks).
    params_bf16 = prepare_params(w1, b1, w2, b2, operand_dtype=jnp.bfloat16)
    params_f32 = prepare_params(w1, b1, w2, b2, operand_dtype=jnp.float32)

    forward = jax.jit(fully_connected_net_forward)

    # 1) Small batch, f32 operands: single-block path, tight tolerance.
    x_small = jax.random.normal(kx1, (8, 1, 28, 28), jnp.float32)
    out_small = jax.block_until_ready(forward(x_small, params_f32))
    ref_small = _reference_forward(x_small, w1, b1, w2, b2)
    assert out_small.shape == (8, 10)
    assert jnp.allclose(out_small, ref_small, atol=1e-4, rtol=1e-4)

    # 2) Larger batch, f32 operands: 2 balanced grid steps (tn=304 for n=600),
    #    ragged last tile handled by pl.cdiv.
    x_big = jax.random.normal(kx2, (600, 1, 28, 28), jnp.float32)
    out_big = jax.block_until_ready(forward(x_big, params_f32))
    ref_big = _reference_forward(x_big, w1, b1, w2, b2)
    assert out_big.shape == (600, 10)
    assert jnp.allclose(out_big, ref_big, atol=1e-4, rtol=1e-4)

    # 3) Default bf16 matmul operands (f32 accumulation): looser tolerance.
    out_bf16 = jax.block_until_ready(forward(x_big, params_bf16))
    assert out_bf16.shape == (600, 10)
    assert jnp.allclose(out_bf16, ref_big, atol=1e-1, rtol=0.0)

    # 4) bf16 activations streamed straight from the "input pipeline"
    #    (halves x HBM bytes; no wrapper-side cast in the hot path).
    out_xbf16 = jax.block_until_ready(forward(x_big.astype(jnp.bfloat16), params_bf16))
    assert out_xbf16.shape == (600, 10)
    assert jnp.allclose(out_xbf16, ref_big, atol=1e-1, rtol=0.0)

    print("KERNEL_OK")
</pallas_src>

<mosaic_0001>
module attributes {stable_mosaic.version = 11 : i64} {
  func.func @_mlp_kernel(%arg0: i32, %arg1: memref<8x784xf32, #tpu.memory_space<vmem>>, %arg2: memref<784x128xf32, #tpu.memory_space<vmem>>, %arg3: memref<1x128xf32, #tpu.memory_space<vmem>>, %arg4: memref<128x128xf32, #tpu.memory_space<vmem>>, %arg5: memref<1x128xf32, #tpu.memory_space<vmem>>, %arg6: memref<8x10xf32, #tpu.memory_space<vmem>>) attributes {dimension_semantics = [#tpu.dimension_semantics<parallel>], iteration_bounds = array<i64: 1>, scalar_prefetch = 0 : i64, scratch_operands = 0 : i64, tpu.core_type = #tpu.core_type<tc>, window_params = [{transform_indices = @transform_0, window_bounds = array<i64: 8, 784>}, {pipeline_mode = #tpu.pipeline_mode<synchronous>, transform_indices = @transform_1, window_bounds = array<i64: 784, 128>}, {pipeline_mode = #tpu.pipeline_mode<synchronous>, transform_indices = @transform_2, window_bounds = array<i64: 1, 128>}, {pipeline_mode = #tpu.pipeline_mode<synchronous>, transform_indices = @transform_3, window_bounds = array<i64: 128, 128>}, {pipeline_mode = #tpu.pipeline_mode<synchronous>, transform_indices = @transform_4, window_bounds = array<i64: 1, 128>}, {transform_indices = @transform_5, window_bounds = array<i64: 8, 10>}]} {
    %c0 = arith.constant 0 : index
    %c0_0 = arith.constant 0 : index
    %0 = vector.load %arg1[%c0, %c0_0] : memref<8x784xf32, #tpu.memory_space<vmem>>, vector<8x784xf32>
    %c0_1 = arith.constant 0 : index
    %c0_2 = arith.constant 0 : index
    %1 = vector.load %arg2[%c0_1, %c0_2] : memref<784x128xf32, #tpu.memory_space<vmem>>, vector<784x128xf32>
    %cst = arith.constant dense<0.000000e+00> : vector<8x128xf32>
    %2 = tpu.matmul %0, %1, %cst {dimension_numbers = #tpu.dot_dimension_numbers<[1], [0], [0], [1], [0, 0, 1, 1], [], []>} : vector<8x784xf32>, vector<784x128xf32>, vector<8x128xf32> -> vector<8x128xf32>
    %c0_3 = arith.constant 0 : index
    %c0_4 = arith.constant 0 : index
    %3 = vector.load %arg3[%c0_3, %c0_4] : memref<1x128xf32, #tpu.memory_space<vmem>>, vector<1x128xf32>
    %4 = vector.broadcast %3 : vector<1x128xf32> to vector<8x128xf32>
    %5 = arith.addf %2, %4 : vector<8x128xf32>
    %cst_5 = arith.constant 0.000000e+00 : f32
    %6 = vector.broadcast %cst_5 : f32 to vector<8x128xf32>
    %7 = arith.maximumf %5, %6 : vector<8x128xf32>
    %c0_6 = arith.constant 0 : index
    %c0_7 = arith.constant 0 : index
    %8 = vector.load %arg4[%c0_6, %c0_7] : memref<128x128xf32, #tpu.memory_space<vmem>>, vector<128x128xf32>
    %cst_8 = arith.constant dense<0.000000e+00> : vector<8x128xf32>
    %9 = tpu.matmul %7, %8, %cst_8 {dimension_numbers = #tpu.dot_dimension_numbers<[1], [0], [0], [1], [0, 0, 1, 1], [], []>} : vector<8x128xf32>, vector<128x128xf32>, vector<8x128xf32> -> vector<8x128xf32>
    %c0_9 = arith.constant 0 : index
    %c0_10 = arith.constant 0 : index
    %10 = vector.load %arg5[%c0_9, %c0_10] : memref<1x128xf32, #tpu.memory_space<vmem>>, vector<1x128xf32>
    %11 = vector.broadcast %10 : vector<1x128xf32> to vector<8x128xf32>
    %12 = arith.addf %9, %11 : vector<8x128xf32>
    %13 = tpu.iota {dimensions = array<i32: 1>} : vector<8x128xi32>
    %c10_i32 = arith.constant 10 : i32
    %14 = vector.broadcast %c10_i32 : i32 to vector<8x128xi32>
    %15 = arith.cmpi slt, %13, %14 : vector<8x128xi32>
    %cst_11 = arith.constant -1.000000e+30 : f32
    %16 = vector.broadcast %cst_11 : f32 to vector<8x128xf32>
    %17 = arith.select %15, %12, %16 : vector<8x128xi1>, vector<8x128xf32>
    %cst_12 = arith.constant dense<0xFF800000> : vector<8xf32>
    %18 = vector.multi_reduction <maximumf>, %17, %cst_12 [1] : vector<8x128xf32> to vector<8xf32>
    %19 = vector.shape_cast %18 : vector<8xf32> to vector<8x1xf32>
    %20 = vector.broadcast %19 : vector<8x1xf32> to vector<8x128xf32>
    %21 = arith.subf %17, %20 : vector<8x128xf32>
    %22 = math.exp %21 : vector<8x128xf32>
    %cst_13 = arith.constant dense<0.000000e+00> : vector<8xf32>
    %23 = vector.multi_reduction <add>, %22, %cst_13 [1] : vector<8x128xf32> to vector<8xf32>
    %24 = vector.shape_cast %23 : vector<8xf32> to vector<8x1xf32>
    %25 = math.log %24 : vector<8x1xf32>
    %26 = vector.broadcast %25 : vector<8x1xf32> to vector<8x128xf32>
    %27 = arith.subf %21, %26 : vector<8x128xf32>
    %28 = vector.extract_strided_slice %27 {offsets = [0, 0], sizes = [8, 10], strides = [1, 1]} : vector<8x128xf32> to vector<8x10xf32>
    %c0_14 = arith.constant 0 : index
    %c0_15 = arith.constant 0 : index
    %29 = vector.load %arg6[%c0_14, %c0_15] : memref<8x10xf32, #tpu.memory_space<vmem>>, vector<8x10xf32>
    tpu.vector_store %arg6[%c0_14, %c0_15], %28 {strides = array<i32>} : memref<8x10xf32, #tpu.memory_space<vmem>>, vector<8x10xf32>,
    return
  }
  func.func @transform_0(%arg0: i32) -> (i32, i32) {
    %c0_i32 = arith.constant 0 : i32
    %c0_i32_0 = arith.constant 0 : i32
    return %arg0, %c0_i32 : i32, i32
  }
  func.func @transform_1(%arg0: i32) -> (i32, i32) {
    %c0_i32 = arith.constant 0 : i32
    %c0_i32_0 = arith.constant 0 : i32
    %c0_i32_1 = arith.constant 0 : i32
    return %c0_i32, %c0_i32_0 : i32, i32
  }
  func.func @transform_2(%arg0: i32) -> (i32, i32) {
    %c0_i32 = arith.constant 0 : i32
    %c0_i32_0 = arith.constant 0 : i32
    %c0_i32_1 = arith.constant 0 : i32
    return %c0_i32, %c0_i32_0 : i32, i32
  }
  func.func @transform_3(%arg0: i32) -> (i32, i32) {
    %c0_i32 = arith.constant 0 : i32
    %c0_i32_0 = arith.constant 0 : i32
    %c0_i32_1 = arith.constant 0 : i32
    return %c0_i32, %c0_i32_0 : i32, i32
  }
  func.func @transform_4(%arg0: i32) -> (i32, i32) {
    %c0_i32 = arith.constant 0 : i32
    %c0_i32_0 = arith.constant 0 : i32
    %c0_i32_1 = arith.constant 0 : i32
    return %c0_i32, %c0_i32_0 : i32, i32
  }
  func.func @transform_5(%arg0: i32) -> (i32, i32) {
    %c0_i32 = arith.constant 0 : i32
    %c0_i32_0 = arith.constant 0 : i32
    return %arg0, %c0_i32 : i32, i32
  }
}

</mosaic_0001>

<llo_original>
// kernel: fully_connected_net_forward.1
$region0: #{fully_connected_net_forward.1}
  #allocation0 [shape = 'u32[]', space=smem, size = 0x4, offset = 0x4, fixed_abs, tag = 'smem constant byte address 0x4 - core index']
  #allocation1 [shape = 'u32[144,128]{1,0:T(1,128)}', space=vmem, size = 0x12000, scoped, tag = 'internal scratch']
  %s0 = inlined_call_operand.vmem [shape: f32[8,784], index: 0, kind: input, shape index: {}]
  %s1 = inlined_call_operand.vmem [shape: f32[784,128], index: 1, kind: input, shape index: {}]
  %s2 = inlined_call_operand.vmem [shape: f32[1,128], index: 2, kind: input, shape index: {}]
  %s3 = inlined_call_operand.hbm [shape: f32[128,128], index: 3, kind: input, shape index: {}]
  %s4 = inlined_call_operand.vmem [shape: f32[1,128], index: 4, kind: input, shape index: {}]
  %s5 = inlined_call_operand.hbm [shape: f32[8,10], index: 5, kind: output, shape index: {}]
  %s6 = sld [smem:[#allocation0]]
  $region34: #{fully_connected_net_forward.1} parent=0
    _
  %s8 = ssub.s32 1, %s6
  %s9 = scalar_select 0, %s8, %s6
  $region1: #{fully_connected_net_forward.1} parent=0
    #allocation2 [shape = 'u8[65536]{0}', space=vmem, size = 0x10000, scoped, tag = 'input window, operand 3, single buffered']
    #allocation3 [shape = 's32[1]{0}', space=sflag, size = 0x4, scoped, tag = 'scoped memory for fully_connected_net_forward.1']
    #allocation4 [shape = 's32[1]{0}', space=sflag, size = 0x4, scoped, tag = 'scoped memory for fully_connected_net_forward.1']
    #allocation5 [shape = 'u8[4096]{0}', space=vmem, size = 0x1000, scoped, tag = 'output window, operand 0, single buffered']
    %10 = vsyncpa [#allocation3], 0
    %11 = vsyncpa [#allocation4], 0
    // Predicated region
    $region2: #{fully_connected_net_forward.1} parent=1 // pred_check
      _
    $region3: #{fully_connected_net_forward.1} parent=1 // pred_check_branch
      %13 = sbr.rel (0) target = $region5
    $region4: #{fully_connected_net_forward.1} parent=1 // pred_region
      _
    $region5: #{fully_connected_net_forward.1} parent=1 // pred_fallthru
      _
    // Predicated region
    $region6: #{fully_connected_net_forward.1} parent=1 // pred_check
      _
    $region7: #{fully_connected_net_forward.1} parent=1 // pred_check_branch
      %15 = sbr.rel (0) target = $region9
    $region8: #{fully_connected_net_forward.1} parent=1 // pred_region
      _
    $region9: #{fully_connected_net_forward.1} parent=1 // pred_fallthru
      _
    // Predicated region
    $region10: #{fully_connected_net_forward.1} parent=1 // pred_check
      _
    $region11: #{fully_connected_net_forward.1} parent=1 // pred_check_branch
      %17 = sbr.rel (0) target = $region13
    $region12: #{fully_connected_net_forward.1} parent=1 // pred_region
      _
    $region13: #{fully_connected_net_forward.1} parent=1 // pred_fallthru
      _
    // Predicated region
    $region14: #{fully_connected_net_forward.1} parent=1 // pred_check
      _
    $region15: #{fully_connected_net_forward.1} parent=1 // pred_check_branch
      %19 = sbr.rel (0) target = $region17
    $region16: #{fully_connected_net_forward.1} parent=1 // pred_region
      %s21 = ssub.s32 2048, 2048
      %22 = vsyncadd [#allocation3], %s21
      %s23 = sshll.u32 [#allocation2], 4
      %s24 = int_to_ptr.vmem [resolvable:$true] %s23
      %29 = dma.hbm_to_vmem [thread:$0]  %s3, 2048, %s24, [#allocation3], 128, 128, 8
    $region17: #{fully_connected_net_forward.1} parent=1 // pred_fallthru
      _
    // Predicated region
    $region18: #{fully_connected_net_forward.1} parent=1 // pred_check
      _
    $region19: #{fully_connected_net_forward.1} parent=1 // pred_check_branch
      %31 = sbr.rel (0) target = $region21
    $region20: #{fully_connected_net_forward.1} parent=1 // pred_region
      _
    $region21: #{fully_connected_net_forward.1} parent=1 // pred_fallthru
      _
    // Predicated region
    $region22: #{fully_connected_net_forward.1} parent=1 // pred_check
      _
    $region23: #{fully_connected_net_forward.1} parent=1 // pred_check_branch
      %33 = sbr.rel (0) target = $region25
    $region24: #{fully_connected_net_forward.1} parent=1 // pred_region
      %34 = dma.done [#allocation3], 2048
    $region25: #{fully_connected_net_forward.1} parent=1 // pred_fallthru
      _
    %v35 = vld [vmem:[%s0] sm:$0xff]
    %v36 = vld [vmem:[%s0 + $0x8] sm:$0xff]
    %v37 = vld [vmem:[%s0 + $0x10] sm:$0xff]
    %v38 = vld [vmem:[%s0 + $0x18] sm:$0xff]
    %v39 = vld [vmem:[%s0 + $0x20] sm:$0xff]
    %v40 = vld [vmem:[%s0 + $0x28] sm:$0xff]
    %v41 = vld [vmem:[%s0 + $0x30] sm:$0xff]
    %v42 = vld [vmem:[%s1] sm:$0xff]
    %v43 = vld [vmem:[%s1 + $0x8] sm:$0xff]
    %v44 = vld [vmem:[%s1 + $0x10] sm:$0xff]
    %v45 = vld [vmem:[%s1 + $0x18] sm:$0xff]
    %v46 = vld [vmem:[%s1 + $0x20] sm:$0xff]
    %v47 = vld [vmem:[%s1 + $0x28] sm:$0xff]
    %v48 = vld [vmem:[%s1 + $0x30] sm:$0xff]
    %v49 = vld [vmem:[%s1 + $0x38] sm:$0xff]
    %v50 = vld [vmem:[%s1 + $0x40] sm:$0xff]
    %v51 = vld [vmem:[%s1 + $0x48] sm:$0xff]
    %v52 = vld [vmem:[%s1 + $0x50] sm:$0xff]
    %v53 = vld [vmem:[%s1 + $0x58] sm:$0xff]
    %v54 = vld [vmem:[%s1 + $0x60] sm:$0xff]
    %v55 = vld [vmem:[%s1 + $0x68] sm:$0xff]
    %v56 = vld [vmem:[%s1 + $0x70] sm:$0xff]
    %v57 = vld [vmem:[%s1 + $0x78] sm:$0xff]
    %v58 = vld [vmem:[%s1 + $0x80] sm:$0xff]
    %v59 = vld [vmem:[%s1 + $0x88] sm:$0xff]
    %v60 = vld [vmem:[%s1 + $0x90] sm:$0xff]
    %v61 = vld [vmem:[%s1 + $0x98] sm:$0xff]
    %v62 = vld [vmem:[%s1 + $0xa0] sm:$0xff]
    %v63 = vld [vmem:[%s1 + $0xa8] sm:$0xff]
    %v64 = vld [vmem:[%s1 + $0xb0] sm:$0xff]
    %v65 = vld [vmem:[%s1 + $0xb8] sm:$0xff]
    %v66 = vld [vmem:[%s1 + $0xc0] sm:$0xff]
    %v67 = vld [vmem:[%s1 + $0xc8] sm:$0xff]
    %v68 = vld [vmem:[%s1 + $0xd0] sm:$0xff]
    %v69 = vld [vmem:[%s1 + $0xd8] sm:$0xff]
    %v70 = vld [vmem:[%s1 + $0xe0] sm:$0xff]
    %v71 = vld [vmem:[%s1 + $0xe8] sm:$0xff]
    %v72 = vld [vmem:[%s1 + $0xf0] sm:$0xff]
    %v73 = vld [vmem:[%s1 + $0xf8] sm:$0xff]
    %v74 = vld [vmem:[%s1 + $0x100] sm:$0xff]
    %v75 = vld [vmem:[%s1 + $0x108] sm:$0xff]
    %v76 = vld [vmem:[%s1 + $0x110] sm:$0xff]
    %v77 = vld [vmem:[%s1 + $0x118] sm:$0xff]
    %v78 = vld [vmem:[%s1 + $0x120] sm:$0xff]
    %v79 = vld [vmem:[%s1 + $0x128] sm:$0xff]
    %v80 = vld [vmem:[%s1 + $0x130] sm:$0xff]
    %v81 = vld [vmem:[%s1 + $0x138] sm:$0xff]
    %v82 = vld [vmem:[%s1 + $0x140] sm:$0xff]
    %v83 = vld [vmem:[%s1 + $0x148] sm:$0xff]
    %v84 = vld [vmem:[%s1 + $0x150] sm:$0xff]
    %v85 = vld [vmem:[%s1 + $0x158] sm:$0xff]
    %v86 = vld [vmem:[%s1 + $0x160] sm:$0xff]
    %v87 = vld [vmem:[%s1 + $0x168] sm:$0xff]
    %v88 = vld [vmem:[%s1 + $0x170] sm:$0xff]
    %v89 = vld [vmem:[%s1 + $0x178] sm:$0xff]
    %v90 = vld [vmem:[%s1 + $0x180] sm:$0xff]
    %v91 = vld [vmem:[%s1 + $0x188] sm:$0xff]
    %v92 = vld [vmem:[%s1 + $0x190] sm:$0xff]
    %v93 = vld [vmem:[%s1 + $0x198] sm:$0xff]
    %v94 = vld [vmem:[%s1 + $0x1a0] sm:$0xff]
    %v95 = vld [vmem:[%s1 + $0x1a8] sm:$0xff]
    %v96 = vld [vmem:[%s1 + $0x1b0] sm:$0xff]
    %v97 = vld [vmem:[%s1 + $0x1b8] sm:$0xff]
    %v98 = vld [vmem:[%s1 + $0x1c0] sm:$0xff]
    %v99 = vld [vmem:[%s1 + $0x1c8] sm:$0xff]
    %v100 = vld [vmem:[%s1 + $0x1d0] sm:$0xff]
    %v101 = vld [vmem:[%s1 + $0x1d8] sm:$0xff]
    %v102 = vld [vmem:[%s1 + $0x1e0] sm:$0xff]
    %v103 = vld [vmem:[%s1 + $0x1e8] sm:$0xff]
    %v104 = vld [vmem:[%s1 + $0x1f0] sm:$0xff]
    %v105 = vld [vmem:[%s1 + $0x1f8] sm:$0xff]
    %v106 = vld [vmem:[%s1 + $0x200] sm:$0xff]
    %v107 = vld [vmem:[%s1 + $0x208] sm:$0xff]
    %v108 = vld [vmem:[%s1 + $0x210] sm:$0xff]
    %v109 = vld [vmem:[%s1 + $0x218] sm:$0xff]
    %v110 = vld [vmem:[%s1 + $0x220] sm:$0xff]
    %v111 = vld [vmem:[%s1 + $0x228] sm:$0xff]
    %v112 = vld [vmem:[%s1 + $0x230] sm:$0xff]
    %v113 = vld [vmem:[%s1 + $0x238] sm:$0xff]
    %v114 = vld [vmem:[%s1 + $0x240] sm:$0xff]
    %v115 = vld [vmem:[%s1 + $0x248] sm:$0xff]
    %v116 = vld [vmem:[%s1 + $0x250] sm:$0xff]
    %v117 = vld [vmem:[%s1 + $0x258] sm:$0xff]
    %v118 = vld [vmem:[%s1 + $0x260] sm:$0xff]
    %v119 = vld [vmem:[%s1 + $0x268] sm:$0xff]
    %v120 = vld [vmem:[%s1 + $0x270] sm:$0xff]
    %v121 = vld [vmem:[%s1 + $0x278] sm:$0xff]
    %v122 = vld [vmem:[%s1 + $0x280] sm:$0xff]
    %v123 = vld [vmem:[%s1 + $0x288] sm:$0xff]
    %v124 = vld [vmem:[%s1 + $0x290] sm:$0xff]
    %v125 = vld [vmem:[%s1 + $0x298] sm:$0xff]
    %v126 = vld [vmem:[%s1 + $0x2a0] sm:$0xff]
    %v127 = vld [vmem:[%s1 + $0x2a8] sm:$0xff]
    %v128 = vld [vmem:[%s1 + $0x2b0] sm:$0xff]
    %v129 = vld [vmem:[%s1 + $0x2b8] sm:$0xff]
    %v130 = vld [vmem:[%s1 + $0x2c0] sm:$0xff]
    %v131 = vld [vmem:[%s1 + $0x2c8] sm:$0xff]
    %v132 = vld [vmem:[%s1 + $0x2d0] sm:$0xff]
    %v133 = vld [vmem:[%s1 + $0x2d8] sm:$0xff]
    %v134 = vld [vmem:[%s1 + $0x2e0] sm:$0xff]
    %v135 = vld [vmem:[%s1 + $0x2e8] sm:$0xff]
    %v136 = vld [vmem:[%s1 + $0x2f0] sm:$0xff]
    %v137 = vld [vmem:[%s1 + $0x2f8] sm:$0xff]
    %v138 = vld [vmem:[%s1 + $0x300] sm:$0xff]
    %v139 = vld [vmem:[%s1 + $0x308] sm:$0xff]
    %v140 = vld [vmem:[%s2] sm:$0x1]
    %v142 = vlaneseq
    %v143 = vshrl.u32 %v142, 7
    %v144 = vsub.s32 0, %v143
    %v145 = vrot.slane %v140, %v144
    %vm147 = vcmask 130048
    %v149 = vsel %vm147, %v41, 0
    %151 = vmatprep.subr.mxu0 0.0
    %152 = vmatpush1.msra.mxu0 %v57
    %153 = vmatprep.subr.mxu0 0.0
    %154 = vmatpush1.msra.mxu0 %v56
    %155 = vmatprep.subr.mxu0 0.0
    %156 = vmatpush1.msra.mxu0 %v55
    %157 = vmatprep.subr.mxu0 0.0
    %158 = vmatpush1.msra.mxu0 %v54
    %159 = vmatprep.subr.mxu0 0.0
    %160 = vmatpush1.msra.mxu0 %v53
    %161 = vmatprep.subr.mxu0 0.0
    %162 = vmatpush1.msra.mxu0 %v52
    %163 = vmatprep.subr.mxu0 0.0
    %164 = vmatpush1.msra.mxu0 %v51
    %165 = vmatprep.subr.mxu0 0.0
    %166 = vmatpush1.msra.mxu0 %v50
    %167 = vmatprep.subr.mxu0 0.0
    %168 = vmatpush1.msra.mxu0 %v49
    %169 = vmatprep.subr.mxu0 0.0
    %170 = vmatpush1.msra.mxu0 %v48
    %171 = vmatprep.subr.mxu0 0.0
    %172 = vmatpush1.msra.mxu0 %v47
    %173 = vmatprep.subr.mxu0 0.0
    %174 = vmatpush1.msra.mxu0 %v46
    %175 = vmatprep.subr.mxu0 0.0
    %176 = vmatpush1.msra.mxu0 %v45
    %177 = vmatprep.subr.mxu0 0.0
    %178 = vmatpush1.msra.mxu0 %v44
    %179 = vmatprep.subr.mxu0 0.0
    %180 = vmatpush1.msra.mxu0 %v43
    %181 = vmatprep.subr.mxu0 0.0
    %182 = vmatpush1.msra.mxu0 %v42
    %183 = vmatprep.subr.mxu0 0.0
    %184 = vmatpush2.msra.mxu0 %v73
    %185 = vmatprep.subr.mxu0 0.0
    %186 = vmatpush2.msra.mxu0 %v72
    %187 = vmatprep.subr.mxu0 0.0
    %188 = vmatpush2.msra.mxu0 %v71
    %189 = vmatprep.subr.mxu0 0.0
    %190 = vmatpush2.msra.mxu0 %v70
    %191 = vmatprep.subr.mxu0 0.0
    %192 = vmatpush2.msra.mxu0 %v69
    %193 = vmatprep.subr.mxu0 0.0
    %194 = vmatpush2.msra.mxu0 %v68
    %195 = vmatprep.subr.mxu0 0.0
    %196 = vmatpush2.msra.mxu0 %v67
    %197 = vmatprep.subr.mxu0 0.0
    %198 = vmatpush2.msra.mxu0 %v66
    %199 = vmatprep.subr.mxu0 0.0
    %200 = vmatpush2.msra.mxu0 %v65
    %201 = vmatprep.subr.mxu0 0.0
    %202 = vmatpush2.msra.mxu0 %v64
    %203 = vmatprep.subr.mxu0 0.0
    %204 = vmatpush2.msra.mxu0 %v63
    %205 = vmatprep.subr.mxu0 0.0
    %206 = vmatpush2.msra.mxu0 %v62
    %207 = vmatprep.subr.mxu0 0.0
    %208 = vmatpush2.msra.mxu0 %v61
    %209 = vmatprep.subr.mxu0 0.0
    %210 = vmatpush2.msra.mxu0 %v60
    %211 = vmatprep.subr.mxu0 0.0
    %212 = vmatpush2.msra.mxu0 %v59
    %213 = vmatprep.subr.mxu0 0.0
    %214 = vmatpush2.msra.mxu0 %v58
    %215 = vmatprep.mubr.f32.mxu0 %v36
    %216 = vmatmul.mubr.f32.gmra.mxu0 %v35
    %v217 = vpop.f32.mrf.mxu0
    %v218 = vadd.f32 %v145, %v217
    %v219 = vpop.f32.mrf.mxu0
    %220 = vdwg.mxu0
    %221 = vmatprep.subr.mxu0 0.0
    %222 = vmatpush1.msra.mxu0 %v89
    %223 = vmatprep.subr.mxu0 0.0
    %224 = vmatpush1.msra.mxu0 %v88
    %225 = vmatprep.subr.mxu0 0.0
    %226 = vmatpush1.msra.mxu0 %v87
    %227 = vmatprep.subr.mxu0 0.0
    %228 = vmatpush1.msra.mxu0 %v86
    %229 = vmatprep.subr.mxu0 0.0
    %230 = vmatpush1.msra.mxu0 %v85
    %231 = vmatprep.subr.mxu0 0.0
    %232 = vmatpush1.msra.mxu0 %v84
    %233 = vmatprep.subr.mxu0 0.0
    %234 = vmatpush1.msra.mxu0 %v83
    %235 = vmatprep.subr.mxu0 0.0
    %236 = vmatpush1.msra.mxu0 %v82
    %237 = vmatprep.subr.mxu0 0.0
    %238 = vmatpush1.msra.mxu0 %v81
    %239 = vmatprep.subr.mxu0 0.0
    %240 = vmatpush1.msra.mxu0 %v80
    %241 = vmatprep.subr.mxu0 0.0
    %242 = vmatpush1.msra.mxu0 %v79
    %243 = vmatprep.subr.mxu0 0.0
    %244 = vmatpush1.msra.mxu0 %v78
    %245 = vmatprep.subr.mxu0 0.0
    %246 = vmatpush1.msra.mxu0 %v77
    %247 = vmatprep.subr.mxu0 0.0
    %248 = vmatpush1.msra.mxu0 %v76
    %249 = vmatprep.subr.mxu0 0.0
    %250 = vmatpush1.msra.mxu0 %v75
    %251 = vmatprep.subr.mxu0 0.0
    %252 = vmatpush1.msra.mxu0 %v74
    %253 = vmatprep.subr.mxu0 0.0
    %254 = vmatpush2.msra.mxu0 %v105
    %255 = vmatprep.subr.mxu0 0.0
    %256 = vmatpush2.msra.mxu0 %v104
    %257 = vmatprep.subr.mxu0 0.0
    %258 = vmatpush2.msra.mxu0 %v103
    %259 = vmatprep.subr.mxu0 0.0
    %260 = vmatpush2.msra.mxu0 %v102
    %261 = vmatprep.subr.mxu0 0.0
    %262 = vmatpush2.msra.mxu0 %v101
    %263 = vmatprep.subr.mxu0 0.0
    %264 = vmatpush2.msra.mxu0 %v100
    %265 = vmatprep.subr.mxu0 0.0
    %266 = vmatpush2.msra.mxu0 %v99
    %267 = vmatprep.subr.mxu0 0.0
    %268 = vmatpush2.msra.mxu0 %v98
    %269 = vmatprep.subr.mxu0 0.0
    %270 = vmatpush2.msra.mxu0 %v97
    %271 = vmatprep.subr.mxu0 0.0
    %272 = vmatpush2.msra.mxu0 %v96
    %273 = vmatprep.subr.mxu0 0.0
    %274 = vmatpush2.msra.mxu0 %v95
    %275 = vmatprep.subr.mxu0 0.0
    %276 = vmatpush2.msra.mxu0 %v94
    %277 = vmatprep.subr.mxu0 0.0
    %278 = vmatpush2.msra.mxu0 %v93
    %279 = vmatprep.subr.mxu0 0.0
    %280 = vmatpush2.msra.mxu0 %v92
    %281 = vmatprep.subr.mxu0 0.0
    %282 = vmatpush2.msra.mxu0 %v91
    %283 = vmatprep.subr.mxu0 0.0
    %284 = vmatpush2.msra.mxu0 %v90
    %285 = vmatprep.mubr.f32.mxu0 %v38
    %286 = vmatmul.mubr.f32.gmra.mxu0 %v37
    %v287 = vpop.f32.mrf.mxu0
    %v288 = vadd.f32 %v218, %v287
    %v289 = vpop.f32.mrf.mxu0
    %290 = vdwg.mxu0
    %291 = vmatprep.subr.mxu0 0.0
    %292 = vmatpush1.msra.mxu0 %v121
    %293 = vmatprep.subr.mxu0 0.0
    %294 = vmatpush1.msra.mxu0 %v120
    %295 = vmatprep.subr.mxu0 0.0
    %296 = vmatpush1.msra.mxu0 %v119
    %297 = vmatprep.subr.mxu0 0.0
    %298 = vmatpush1.msra.mxu0 %v118
    %299 = vmatprep.subr.mxu0 0.0
    %300 = vmatpush1.msra.mxu0 %v117
    %301 = vmatprep.subr.mxu0 0.0
    %302 = vmatpush1.msra.mxu0 %v116
    %303 = vmatprep.subr.mxu0 0.0
    %304 = vmatpush1.msra.mxu0 %v115
    %305 = vmatprep.subr.mxu0 0.0
    %306 = vmatpush1.msra.mxu0 %v114
    %307 = vmatprep.subr.mxu0 0.0
    %308 = vmatpush1.msra.mxu0 %v113
    %309 = vmatprep.subr.mxu0 0.0
    %310 = vmatpush1.msra.mxu0 %v112
    %311 = vmatprep.subr.mxu0 0.0
    %312 = vmatpush1.msra.mxu0 %v111
    %313 = vmatprep.subr.mxu0 0.0
    %314 = vmatpush1.msra.mxu0 %v110
    %315 = vmatprep.subr.mxu0 0.0
    %316 = vmatpush1.msra.mxu0 %v109
    %317 = vmatprep.subr.mxu0 0.0
    %318 = vmatpush1.msra.mxu0 %v108
    %319 = vmatprep.subr.mxu0 0.0
    %320 = vmatpush1.msra.mxu0 %v107
    %321 = vmatprep.subr.mxu0 0.0
    %322 = vmatpush1.msra.mxu0 %v106
    %323 = vmatprep.subr.mxu0 0.0
    %324 = vmatpush2.msra.mxu0 %v137
    %325 = vmatprep.subr.mxu0 0.0
    %326 = vmatpush2.msra.mxu0 %v136
    %327 = vmatprep.subr.mxu0 0.0
    %328 = vmatpush2.msra.mxu0 %v135
    %329 = vmatprep.subr.mxu0 0.0
    %330 = vmatpush2.msra.mxu0 %v134
    %331 = vmatprep.subr.mxu0 0.0
    %332 = vmatpush2.msra.mxu0 %v133
    %333 = vmatprep.subr.mxu0 0.0
    %334 = vmatpush2.msra.mxu0 %v132
    %335 = vmatprep.subr.mxu0 0.0
    %336 = vmatpush2.msra.mxu0 %v131
    %337 = vmatprep.subr.mxu0 0.0
    %338 = vmatpush2.msra.mxu0 %v130
    %339 = vmatprep.subr.mxu0 0.0
    %340 = vmatpush2.msra.mxu0 %v129
    %341 = vmatprep.subr.mxu0 0.0
    %342 = vmatpush2.msra.mxu0 %v128
    %343 = vmatprep.subr.mxu0 0.0
    %344 = vmatpush2.msra.mxu0 %v127
    %345 = vmatprep.subr.mxu0 0.0
    %346 = vmatpush2.msra.mxu0 %v126
    %347 = vmatprep.subr.mxu0 0.0
    %348 = vmatpush2.msra.mxu0 %v125
    %349 = vmatprep.subr.mxu0 0.0
    %350 = vmatpush2.msra.mxu0 %v124
    %351 = vmatprep.subr.mxu0 0.0
    %352 = vmatpush2.msra.mxu0 %v123
    %353 = vmatprep.subr.mxu0 0.0
    %354 = vmatpush2.msra.mxu0 %v122
    %355 = vmatprep.mubr.f32.mxu0 %v40
    %356 = vmatmul.mubr.f32.gmra.mxu0 %v39
    %v357 = vpop.f32.mrf.mxu0
    %v358 = vadd.f32 %v288, %v357
    %v359 = vpop.f32.mrf.mxu0
    %360 = vdwg.mxu0
    %361 = vmatprep.subr.mxu0 0.0
    %362 = vmatpush1.msra.mxu0 0.0
    %363 = vmatprep.subr.mxu0 0.0
    %364 = vmatpush1.msra.mxu0 0.0
    %365 = vmatprep.subr.mxu0 0.0
    %366 = vmatpush1.msra.mxu0 0.0
    %367 = vmatprep.subr.mxu0 0.0
    %368 = vmatpush1.msra.mxu0 0.0
    %369 = vmatprep.subr.mxu0 0.0
    %370 = vmatpush1.msra.mxu0 0.0
    %371 = vmatprep.subr.mxu0 0.0
    %372 = vmatpush1.msra.mxu0 0.0
    %373 = vmatprep.subr.mxu0 0.0
    %374 = vmatpush1.msra.mxu0 0.0
    %375 = vmatprep.subr.mxu0 0.0
    %376 = vmatpush1.msra.mxu0 0.0
    %377 = vmatprep.subr.mxu0 0.0
    %378 = vmatpush1.msra.mxu0 0.0
    %379 = vmatprep.subr.mxu0 0.0
    %380 = vmatpush1.msra.mxu0 0.0
    %381 = vmatprep.subr.mxu0 0.0
    %382 = vmatpush1.msra.mxu0 0.0
    %383 = vmatprep.subr.mxu0 0.0
    %384 = vmatpush1.msra.mxu0 0.0
    %385 = vmatprep.subr.mxu0 0.0
    %386 = vmatpush1.msra.mxu0 0.0
    %387 = vmatprep.subr.mxu0 0.0
    %388 = vmatpush1.msra.mxu0 0.0
    %389 = vmatprep.subr.mxu0 0.0
    %390 = vmatpush1.msra.mxu0 %v139
    %391 = vmatprep.subr.mxu0 0.0
    %392 = vmatpush1.msra.mxu0 %v138
    %393 = vmatprep.subr.mxu0 0.0
    %394 = vmatpush2.msra.mxu0 0.0
    %395 = vmatprep.subr.mxu0 0.0
    %396 = vmatpush2.msra.mxu0 0.0
    %397 = vmatprep.subr.mxu0 0.0
    %398 = vmatpush2.msra.mxu0 0.0
    %399 = vmatprep.subr.mxu0 0.0
    %400 = vmatpush2.msra.mxu0 0.0
    %401 = vmatprep.subr.mxu0 0.0
    %402 = vmatpush2.msra.mxu0 0.0
    %403 = vmatprep.subr.mxu0 0.0
    %404 = vmatpush2.msra.mxu0 0.0
    %405 = vmatprep.subr.mxu0 0.0
    %406 = vmatpush2.msra.mxu0 0.0
    %407 = vmatprep.subr.mxu0 0.0
    %408 = vmatpush2.msra.mxu0 0.0
    %409 = vmatprep.subr.mxu0 0.0
    %410 = vmatpush2.msra.mxu0 0.0
    %411 = vmatprep.subr.mxu0 0.0
    %412 = vmatpush2.msra.mxu0 0.0
    %413 = vmatprep.subr.mxu0 0.0
    %414 = vmatpush2.msra.mxu0 0.0
    %415 = vmatprep.subr.mxu0 0.0
    %416 = vmatpush2.msra.mxu0 0.0
    %417 = vmatprep.subr.mxu0 0.0
    %418 = vmatpush2.msra.mxu0 0.0
    %419 = vmatprep.subr.mxu0 0.0
    %420 = vmatpush2.msra.mxu0 0.0
    %421 = vmatprep.subr.mxu0 0.0
    %422 = vmatpush2.msra.mxu0 0.0
    %423 = vmatprep.subr.mxu0 0.0
    %424 = vmatpush2.msra.mxu0 0.0
    %425 = vmatprep.mubr.f32.mxu0 0.0
    %426 = vmatmul.mubr.f32.gmra.mxu0 %v149
    %v427 = vpop.f32.mrf.mxu0
    %v428 = vadd.f32 %v358, %v427
    %v429 = vpop.f32.mrf.mxu0
    %430 = vdwg.mxu0
    %v431 = vmax.f32 %v428, 0.0
    %v432 = vld [vmem:[#allocation2] sm:$0xff]
    %v433 = vld [vmem:[#allocation2 + $0x8] sm:$0xff]
    %v434 = vld [vmem:[#allocation2 + $0x10] sm:$0xff]
    %v435 = vld [vmem:[#allocation2 + $0x18] sm:$0xff]
    %v436 = vld [vmem:[#allocation2 + $0x20] sm:$0xff]
    %v437 = vld [vmem:[#allocation2 + $0x28] sm:$0xff]
    %v438 = vld [vmem:[#allocation2 + $0x30] sm:$0xff]
    %v439 = vld [vmem:[#allocation2 + $0x38] sm:$0xff]
    %v440 = vld [vmem:[#allocation2 + $0x40] sm:$0xff]
    %v441 = vld [vmem:[#allocation2 + $0x48] sm:$0xff]
    %v442 = vld [vmem:[#allocation2 + $0x50] sm:$0xff]
    %v443 = vld [vmem:[#allocation2 + $0x58] sm:$0xff]
    %v444 = vld [vmem:[#allocation2 + $0x60] sm:$0xff]
    %v445 = vld [vmem:[#allocation2 + $0x68] sm:$0xff]
    %v446 = vld [vmem:[#allocation2 + $0x70] sm:$0xff]
    %v447 = vld [vmem:[#allocation2 + $0x78] sm:$0xff]
    %v448 = vld [vmem:[%s4] sm:$0x1]
    %v450 = vlaneseq
    %v451 = vshrl.u32 %v450, 7
    %v452 = vsub.s32 0, %v451
    %v453 = vrot.slane %v448, %v452
    %455 = vmatprep.subr.mxu0 0.0
    %456 = vmatpush1.msra.mxu0 %v447
    %457 = vmatprep.subr.mxu0 0.0
    %458 = vmatpush1.msra.mxu0 %v446
    %459 = vmatprep.subr.mxu0 0.0
    %460 = vmatpush1.msra.mxu0 %v445
    %461 = vmatprep.subr.mxu0 0.0
    %462 = vmatpush1.msra.mxu0 %v444
    %463 = vmatprep.subr.mxu0 0.0
    %464 = vmatpush1.msra.mxu0 %v443
    %465 = vmatprep.subr.mxu0 0.0
    %466 = vmatpush1.msra.mxu0 %v442
    %467 = vmatprep.subr.mxu0 0.0
    %468 = vmatpush1.msra.mxu0 %v441
    %469 = vmatprep.subr.mxu0 0.0
    %470 = vmatpush1.msra.mxu0 %v440
    %471 = vmatprep.subr.mxu0 0.0
    %472 = vmatpush1.msra.mxu0 %v439
    %473 = vmatprep.subr.mxu0 0.0
    %474 = vmatpush1.msra.mxu0 %v438
    %475 = vmatprep.subr.mxu0 0.0
    %476 = vmatpush1.msra.mxu0 %v437
    %477 = vmatprep.subr.mxu0 0.0
    %478 = vmatpush1.msra.mxu0 %v436
    %479 = vmatprep.subr.mxu0 0.0
    %480 = vmatpush1.msra.mxu0 %v435
    %481 = vmatprep.subr.mxu0 0.0
    %482 = vmatpush1.msra.mxu0 %v434
    %483 = vmatprep.subr.mxu0 0.0
    %484 = vmatpush1.msra.mxu0 %v433
    %485 = vmatprep.subr.mxu0 0.0
    %486 = vmatpush1.msra.mxu0 %v432
    %487 = vmatprep.subr.mxu0 0.0
    %488 = vmatpush2.msra.mxu0 0.0
    %489 = vmatprep.subr.mxu0 0.0
    %490 = vmatpush2.msra.mxu0 0.0
    %491 = vmatprep.subr.mxu0 0.0
    %492 = vmatpush2.msra.mxu0 0.0
    %493 = vmatprep.subr.mxu0 0.0
    %494 = vmatpush2.msra.mxu0 0.0
    %495 = vmatprep.subr.mxu0 0.0
    %496 = vmatpush2.msra.mxu0 0.0
    %497 = vmatprep.subr.mxu0 0.0
    %498 = vmatpush2.msra.mxu0 0.0
    %499 = vmatprep.subr.mxu0 0.0
    %500 = vmatpush2.msra.mxu0 0.0
    %501 = vmatprep.subr.mxu0 0.0
    %502 = vmatpush2.msra.mxu0 0.0
    %503 = vmatprep.subr.mxu0 0.0
    %504 = vmatpush2.msra.mxu0 0.0
    %505 = vmatprep.subr.mxu0 0.0
    %506 = vmatpush2.msra.mxu0 0.0
    %507 = vmatprep.subr.mxu0 0.0
    %508 = vmatpush2.msra.mxu0 0.0
    %509 = vmatprep.subr.mxu0 0.0
    %510 = vmatpush2.msra.mxu0 0.0
    %511 = vmatprep.subr.mxu0 0.0
    %512 = vmatpush2.msra.mxu0 0.0
    %513 = vmatprep.subr.mxu0 0.0
    %514 = vmatpush2.msra.mxu0 0.0
    %515 = vmatprep.subr.mxu0 0.0
    %516 = vmatpush2.msra.mxu0 0.0
    %517 = vmatprep.subr.mxu0 0.0
    %518 = vmatpush2.msra.mxu0 0.0
    %519 = vmatprep.mubr.f32.mxu0 0.0
    %520 = vmatmul.mubr.f32.gmra.mxu0 %v431
    %v521 = vpop.f32.mrf.mxu0
    %v522 = vadd.f32 %v453, %v521
    %v523 = vpop.f32.mrf.mxu0
    %524 = vdwg.mxu0
    %v525 = vlaneseq
    %v526 = vand.u32 %v525, 127
    %vm527 = vcmp.lt.s32.totalorder %v526, 10
    %v528 = vsel %vm527, %v522, -1e+30
    %529 = vmax.xlane.f32.xlu0 %v528
    %v530 = vpop.xlane.xlu0 %529
    %v531 = vsub.f32 %v528, %v530
    %v532 = vmul.f32 %v531, 1.442695
    %v533 = vpow.pop %v532
    %534 = vadd.xlane.f32.xlu0 %v533
    %v535 = vpop.xlane.xlu0 %534
    %v536 = vlog2.pop %v535
    %v537 = vmul.f32 %v536, 0.6931472
    %v538 = vsub.f32 %v531, %v537
    %vm539 = vcmask 80896
    %540 = vst.msk [vmem:[#allocation5] sm:$0xff] %vm539, %v538
    // Predicated region
    $region26: #{fully_connected_net_forward.1} parent=1 // pred_check
      _
    $region27: #{fully_connected_net_forward.1} parent=1 // pred_check_branch
      %542 = sbr.rel (0) target = $region29
    $region28: #{fully_connected_net_forward.1} parent=1 // pred_region
      %s544 = ssub.s32 128, 128
      %545 = vsyncadd [#allocation4], %s544
      %s547 = sshll.u32 [#allocation5], 4
      %s548 = int_to_ptr.vmem [resolvable:$true] %s547
      %550 = dma.vmem_to_hbm [thread:$0]  %s548, 128, %s5, [#allocation4]
    $region29: #{fully_connected_net_forward.1} parent=1 // pred_fallthru
      _
    // Predicated region
    $region30: #{fully_connected_net_forward.1} parent=1 // pred_check
      _
    $region31: #{fully_connected_net_forward.1} parent=1 // pred_check_branch
      %552 = sbr.rel (0) target = $region33
    $region32: #{fully_connected_net_forward.1} parent=1 // pred_region
      %553 = dma.done [#allocation4], 128
    $region33: #{fully_connected_net_forward.1} parent=1 // pred_fallthru
      _
    %554 = vsyncpa [#allocation3], 1
    %555 = vsyncpa [#allocation4], 1

</llo_original>
